<compile_context>
chip_gen: v5e
topology: v5e:2x2
jax: 0.10.0
libtpu: 0.0.40
codegen_flags: <defaults>
</compile_context>

<pallas_src>
import numpy as np
import jax
import jax.numpy as jnp
from jax import lax
from jax.experimental import pallas as pl
from jax.experimental.pallas import tpu as pltpu


# ----------------------------------------------------------------------------
# Fixed (non-learned) edge-detection kernels, built exactly as in
# getInformative().  Compile-time constants baked into the kernel.
# ----------------------------------------------------------------------------
def _make_edge_kernels():
    k = np.zeros((3, 1, 3, 3), dtype=np.float32)
    k[0, 0, :, 2] = 1
    k[1, 0, 0, 0] = 1
    k[1, 0, 1:2, 1] = 1
    k[2, 0, 0, 0] = 1
    k[2, 0, 1, 1] = 1
    k[2, 0, 2, 2] = 1
    k_hor = np.concatenate((k[1:0:-1, :, :, ::-1], k), 0).copy()   # (4,1,3,3)
    k_ver = k_hor.transpose((0, 1, 3, 2)).copy()                   # (4,1,3,3)
    return k_hor, k_ver


K_HOR, K_VER = _make_edge_kernels()
N_DIR = K_HOR.shape[0]          # 4
N_CH = 4 * N_DIR                # 16 output channels in x3

# Deterministic __init__ attributes (unused by the live forward path, kept for
# parity with the PyTorch constructor).
np.random.seed(1); H1 = np.random.randint(-6, 7, 16)
np.random.seed(2); W1 = np.random.randint(-6, 7, 16)
H2 = np.random.randint(-3, 4, 16)
np.random.seed(3); W2 = np.random.randint(-3, 4, 16)


def _pad_to(n, m):
    return ((n + m - 1) // m) * m


# ----------------------------------------------------------------------------
# Pallas kernel: one block of bt lane-groups per grid step.
#   in : x_ref  (R, L)           R = bt*Hp rows, L = P*Wp lanes (P packed imgs)
#   out: x3_ref (R, 16*L)        channel-major, lane-dense edge responses
#        x4_ref (R, L)           channel-wise max of the 16 channels
# ----------------------------------------------------------------------------
def _make_kernel(H, Hp, W, Wp, P, bt, k_hor, k_ver, with_x3):
    R = bt * Hp          # rows per block
    L = P * Wp           # lanes per block per channel

    def kernel(x_ref, *out_refs):
        if with_x3:
            x3_ref, x4_ref = out_refs
        else:
            (x4_ref,) = out_refs

        x = x_ref[...]                                            # (R, L) f32
        rows = lax.broadcasted_iota(jnp.int32, (R, L), 0) % Hp    # hoisted
        wcol = lax.broadcasted_iota(jnp.int32, (R, L), 1) % Wp    # hoisted
        zero = jnp.float32(0.0)

        # ---- hoisted per-image boundary masks (built once, memoized) --------
        row_masks, col_masks = {}, {}

        def row_keep(dy):   # source row r-dy is a valid data row of same image
            if dy not in row_masks:
                row_masks[dy] = (rows >= dy) if dy > 0 else (rows < H + dy)
            return row_masks[dy]

        def col_keep(dx):   # source col w-dx is a valid data col of same image
            if dx not in col_masks:
                col_masks[dx] = (wcol >= dx) if dx > 0 else (wcol < W + dx)
            return col_masks[dx]

        # ---- memoized shifted copies of x (<=9 (R,L) planes) ----------------
        # NOTE: if a bundle dump ever shows the vld slot binding (3 slots vs 4
        # VALU), recompute the lane-only shifts in the second branch instead.
        col_base, nbrs = {}, {}

        def nbr(dy, dx):
            """nbr(dy,dx)[r,c] == x[r-dy, c-dx] of the SAME image, 0 outside."""
            key = (dy, dx)
            if key in nbrs:
                return nbrs[key]
            if dx not in col_base:
                y = x
                if dx != 0:
                    y = pltpu.roll(x, shift=dx % L, axis=1)
                    y = jnp.where(col_keep(dx), y, zero)
                col_base[dx] = y
            y = col_base[dx]
            if dy != 0:
                y = pltpu.roll(y, shift=dy % R, axis=0)
                y = jnp.where(row_keep(dy), y, zero)
            nbrs[key] = y
            return y

        def conv3x3(w33):
            """3x3 correlation, zero padded.  All taps are 0/1 -> no vmul."""
            acc = None
            for ky in range(3):
                for kx in range(3):
                    wv = float(w33[ky, kx])
                    if wv == 0.0:
                        continue
                    t = nbr(1 - ky, 1 - kx)
                    if wv != 1.0:
                        t = wv * t
                    acc = t if acc is None else acc + t
            return acc if acc is not None else jnp.zeros((R, L), jnp.float32)

        up_ok = row_keep(1)      # has an in-image neighbour above (r-1)
        dn_ok = row_keep(-1)     # has an in-image neighbour below (r+1)
        left_ok = col_keep(1)    # has an in-image neighbour to the left (w-1)

        def nms_fold(g, pos_c, neg_c, x4):
            """ReLU + (3,1) stride-1 max-pool NMS for +g and -g sharing the same
            rolls (boundary fill = centre value: exact for max and min).
            Store both channels (if requested) and fold into the running max."""
            g_up = jnp.where(up_ok, pltpu.roll(g, shift=1, axis=0), g)
            g_dn = jnp.where(dn_ok, pltpu.roll(g, shift=R - 1, axis=0), g)
            hi = jnp.maximum(jnp.maximum(g, g_up), g_dn)
            lo = jnp.minimum(jnp.minimum(g, g_up), g_dn)
            p = jnp.maximum(g, zero)                  # relu(+g)
            n = jnp.maximum(-g, zero)                 # relu(-g)
            # == (max_pool(relu(+-g)) == relu(+-g)) * relu(+-g), exactly.
            out_p = jnp.where(hi == g, p, zero)
            out_n = jnp.where(lo == g, n, zero)
            if with_x3:
                x3_ref[:, pos_c * L:(pos_c + 1) * L] = out_p
                x3_ref[:, neg_c * L:(neg_c + 1) * L] = out_n
            m = jnp.maximum(out_p, out_n)
            return m if x4 is None else jnp.maximum(x4, m)

        x4 = None

        # ---- horizontal branch: conv(k_hor) then d/dx finite difference -----
        # shifted conv = XLU lane-roll of conv + boundary zero (not re-summed).
        for c in range(N_DIR):
            conv = conv3x3(k_hor[c, 0])
            convl = jnp.where(left_ok, pltpu.roll(conv, shift=1, axis=1), zero)
            x4 = nms_fold(conv - convl, c, N_DIR + c, x4)

        # ---- vertical branch: conv(k_ver) then d/dy finite difference -------
        for c in range(N_DIR):
            conv = conv3x3(k_ver[c, 0])
            convu = jnp.where(up_ok, pltpu.roll(conv, shift=1, axis=0), zero)
            x4 = nms_fold(conv - convu, 2 * N_DIR + c, 3 * N_DIR + c, x4)

        x4_ref[...] = x4

    return kernel


# ----------------------------------------------------------------------------
# Packing / tiling policy
# ----------------------------------------------------------------------------
def _pick_lane_pack(B, W):
    """Pick (P, Wp): pack P images (each padded to Wp cols) along the lane axis
    so the packed lane width P*Wp is exactly 128 with < 2x padding, if possible."""
    if W >= 128:
        return 1, W
    best = None
    for P in range(1, min(B, 128) + 1):
        if B % P or 128 % P:
            continue
        Wp = 128 // P
        if Wp < W or Wp >= 2 * W:
            continue
        if best is None or Wp < best[1]:
            best = (P, Wp)
    if best is not None:
        return best
    # Fallback: no column padding, pack as many images as fit in 128 lanes.
    P = 1
    for d in range(1, min(B, 128) + 1):
        if B % d == 0 and d * W <= 128:
            P = d
    return P, W


def _pick_group_tile(G, Hp, L, with_x3, target_bytes=2 << 20):
    """Lane-groups per grid step: big blocks (amortize ~0.35us/step, larger
    writeback DMAs) while preferring an even step count >= 2 (keeps both v7x
    TensorCores fed).  ~2 MiB blocks double-buffer comfortably inside the
    scoped-VMEM defaults of v5e/v6e/v7x."""
    n_planes = 2 + (N_CH if with_x3 else 0)          # x + x4 (+ 16 x3 channels)
    per_group = n_planes * Hp * L * 4
    cap = max(1, target_bytes // max(per_group, 1))
    best_key, best_d = None, G
    for d in range(1, G + 1):
        if G % d or d > cap:
            continue
        steps = G // d
        key = (0 if (steps >= 2 and steps % 2 == 0) else 1, -d)
        if best_key is None or key < best_key:
            best_key, best_d = key, d
    return best_d


def _pack_input(x, P, Hp, Wp):
    """(B,1,H,W) -> (G*Hp, P*Wp): P zero-padded images per lane-group row."""
    B, _, H, W = x.shape
    G = B // P
    img = x[:, 0].astype(jnp.float32)
    if Hp > H or Wp > W:
        img = jnp.pad(img, ((0, 0), (0, Hp - H), (0, Wp - W)))
    return img.reshape(G, P, Hp, Wp).transpose(0, 2, 1, 3).reshape(G * Hp, P * Wp)


def _unpack_x3(x3_packed, B, H, W, P, Hp, Wp):
    G = B // P
    x3 = x3_packed.reshape(G, Hp, N_CH, P, Wp)
    x3 = jnp.transpose(x3, (0, 3, 2, 1, 4))[:, :, :, :H, :W]
    return x3.reshape(B, N_CH, H, W)


def _unpack_x4(x4_packed, B, H, W, P, Hp, Wp):
    G = B // P
    x4 = x4_packed.reshape(G, Hp, P, Wp)
    x4 = jnp.transpose(x4, (0, 2, 1, 3))[:, :, :H, :W]
    return x4.reshape(B, 1, H, W)


def _run_kernel(x, with_x3):
    B, C, H, W = x.shape
    assert C == 1, "MyLeNet expects single-channel input"
    P, Wp = _pick_lane_pack(B, W)
    Hp = _pad_to(H, 8)
    G, L = B // P, P * Wp
    bt = _pick_group_tile(G, Hp, L, with_x3)
    R = bt * Hp

    x_packed = _pack_input(x, P, Hp, Wp)

    x4_shape = jax.ShapeDtypeStruct((G * Hp, L), jnp.float32)
    x4_spec = pl.BlockSpec((R, L), lambda i: (i, 0))
    if with_x3:
        out_shape = (jax.ShapeDtypeStruct((G * Hp, N_CH * L), jnp.float32),
                     x4_shape)
        out_specs = [pl.BlockSpec((R, N_CH * L), lambda i: (i, 0)), x4_spec]
    else:
        out_shape = x4_shape
        out_specs = x4_spec

    outs = pl.pallas_call(
        _make_kernel(H, Hp, W, Wp, P, bt, K_HOR, K_VER, with_x3),
        out_shape=out_shape,
        grid_spec=pltpu.PrefetchScalarGridSpec(
            num_scalar_prefetch=0,
            grid=(G // bt,),
            in_specs=[pl.BlockSpec((R, L), lambda i: (i, 0))],
            out_specs=out_specs,
        ),
        compiler_params=pltpu.CompilerParams(dimension_semantics=("parallel",)),
    )(x_packed)

    if with_x3:
        x3_packed, x4_packed = outs
    else:
        x3_packed, x4_packed = None, outs
    return x3_packed, x4_packed, (P, Hp, Wp)


# ----------------------------------------------------------------------------
# Entry points
# ----------------------------------------------------------------------------
@jax.jit
def get_informative_packed(x):
    """Hot path: lane-packed x3/x4 slabs (no HBM-side NCHW repack of x3)."""
    x3_p, x4_p, _ = _run_kernel(x, with_x3=True)
    return x3_p, x4_p


@jax.jit
def get_informative_x4(x):
    """x4 only: x3 never leaves the kernel (skips ~16/18 of HBM traffic)."""
    B, _, H, W = x.shape
    _, x4_p, (P, Hp, Wp) = _run_kernel(x, with_x3=False)
    return _unpack_x4(x4_p, B, H, W, P, Hp, Wp)


@jax.jit
def get_informative(x):
    """NCHW x3/x4 -- parity with the PyTorch tensors (verification path; the
    NCHW repack of x3 is layout plumbing outside the hot path)."""
    B, _, H, W = x.shape
    x3_p, x4_p, (P, Hp, Wp) = _run_kernel(x, with_x3=True)
    return (_unpack_x3(x3_p, B, H, W, P, Hp, Wp),
            _unpack_x4(x4_p, B, H, W, P, Hp, Wp))


def my_lenet_forward(x):
    """Mirrors MyLeNet.forward: run getInformative(x), then return 0."""
    x3_p, x4_p = get_informative_packed(x)
    return 0, (x3_p, x4_p)


# ----------------------------------------------------------------------------
# Pure-JAX reference of getInformative() (for in-script verification).
# Mirrors the PyTorch ops (and the kernel's tap accumulation order).
# ----------------------------------------------------------------------------
def _reference_get_informative(x):
    B, C, H, W = x.shape
    img = x[:, 0].astype(jnp.float32)                     # (B,H,W)
    pad = jnp.pad(img, ((0, 0), (1, 1), (1, 1)))

    def conv(k33):
        acc = None
        for ky in range(3):
            for kx in range(3):
                wv = float(k33[ky, kx])
                if wv == 0.0:
                    continue
                t = pad[:, ky:ky + H, kx:kx + W]
                if wv != 1.0:
                    t = wv * t
                acc = t if acc is None else acc + t
        return acc

    def branch(kset, diff_axis):
        c = jnp.stack([conv(kset[i, 0]) for i in range(N_DIR)], axis=1)
        if diff_axis == "w":
            shifted = jnp.pad(c, ((0, 0), (0, 0), (0, 0), (1, 0)))[:, :, :, :W]
        else:
            shifted = jnp.pad(c, ((0, 0), (0, 0), (1, 0), (0, 0)))[:, :, :H, :]
        g = c - shifted
        g = jnp.concatenate([g, -g], axis=1)
        g = jnp.maximum(g, 0.0)                           # relu
        padh = jnp.pad(g, ((0, 0), (0, 0), (1, 1), (0, 0)),
                       constant_values=-jnp.inf)
        pooled = jnp.maximum(jnp.maximum(padh[:, :, 0:H], padh[:, :, 1:H + 1]),
                             padh[:, :, 2:H + 2])
        return jnp.where(pooled == g, g, 0.0)

    x1 = branch(K_HOR, "w")
    x2 = branch(K_VER, "h")
    x3 = jnp.concatenate([x1, x2], axis=1)
    x4 = jnp.max(x3, axis=1, keepdims=True)
    return x3, x4


if __name__ == "__main__":
    key_a, key_b, key_c = jax.random.split(jax.random.PRNGKey(0), 3)

    # Config A: 16x16 images, batch 16 -> 8 images packed per 128-lane row,
    # 2 lane-groups -> an even grid of 2 parallel steps.
    xa = jax.random.normal(key_a, (16, 1, 16, 16), dtype=jnp.float32)
    out, (x3_p, x4_p) = my_lenet_forward(xa)
    jax.block_until_ready((x3_p, x4_p))
    assert out == 0

    x3a, x4a = get_informative(xa)
    x3a_r, x4a_r = _reference_get_informative(xa)
    assert x3a.shape == (16, N_CH, 16, 16) and x4a.shape == (16, 1, 16, 16)
    assert bool(jnp.allclose(x3a, x3a_r, atol=1e-6, rtol=0.0)), "x3 mismatch (A)"
    assert bool(jnp.allclose(x4a, x4a_r, atol=1e-6, rtol=0.0)), "x4 mismatch (A)"

    x4_only = get_informative_x4(xa)
    assert bool(jnp.allclose(x4_only, x4a_r, atol=1e-6, rtol=0.0)), "x4-only mismatch"

    # Config B: MNIST-like 28x28 (H,W not multiples of 8/128): rows padded
    # 28->32, cols padded 28->32, 4 images per 128-lane row.
    xb = jax.random.normal(key_b, (4, 1, 28, 28), dtype=jnp.float32)
    x3b, x4b = get_informative(xb)
    x3b_r, x4b_r = _reference_get_informative(xb)
    assert bool(jnp.allclose(x3b, x3b_r, atol=1e-6, rtol=0.0)), "x3 mismatch (B)"
    assert bool(jnp.allclose(x4b, x4b_r, atol=1e-6, rtol=0.0)), "x4 mismatch (B)"

    # Config C: tiny batch exercising the no-padding fallback (sub-128 lanes).
    xc = jax.random.normal(key_c, (2, 1, 16, 16), dtype=jnp.float32)
    x3c, x4c = get_informative(xc)
    x3c_r, x4c_r = _reference_get_informative(xc)
    assert bool(jnp.allclose(x3c, x3c_r, atol=1e-6, rtol=0.0)), "x3 mismatch (C)"
    assert bool(jnp.allclose(x4c, x4c_r, atol=1e-6, rtol=0.0)), "x4 mismatch (C)"

    jax.block_until_ready((x3a, x4a, x4_only, x3b, x4b, x3c, x4c))
    print("KERNEL_OK")
</pallas_src>

<mosaic_0001>
module attributes {stable_mosaic.version = 11 : i64} {
  func.func @kernel(%arg0: i32, %arg1: memref<16x128xf32, #tpu.memory_space<vmem>>, %arg2: memref<16x2048xf32, #tpu.memory_space<vmem>>, %arg3: memref<16x128xf32, #tpu.memory_space<vmem>>) attributes {dimension_semantics = [#tpu.dimension_semantics<parallel>], iteration_bounds = array<i64: 2>, scalar_prefetch = 0 : i64, scratch_operands = 0 : i64, tpu.core_type = #tpu.core_type<tc>, window_params = [{transform_indices = @transform_0, window_bounds = array<i64: 16, 128>}, {transform_indices = @transform_1, window_bounds = array<i64: 16, 2048>}, {transform_indices = @transform_2, window_bounds = array<i64: 16, 128>}]} {
    %c0 = arith.constant 0 : index
    %c0_0 = arith.constant 0 : index
    %0 = vector.load %arg1[%c0, %c0_0] : memref<16x128xf32, #tpu.memory_space<vmem>>, vector<16x128xf32>
    %1 = tpu.iota {dimensions = array<i32: 0>} : vector<16x128xi32>
    %c16_i32 = arith.constant 16 : i32
    %c0_i32 = arith.constant 0 : i32
    %2 = arith.cmpi eq, %c16_i32, %c0_i32 : i32
    %c1_i32 = arith.constant 1 : i32
    %3 = arith.select %2, %c1_i32, %c16_i32 : i32
    %4 = vector.broadcast %3 : i32 to vector<16x128xi32>
    %5 = arith.remsi %1, %4 : vector<16x128xi32>
    %c0_i32_1 = arith.constant 0 : i32
    %6 = vector.broadcast %c0_i32_1 : i32 to vector<16x128xi32>
    %7 = arith.cmpi ne, %5, %6 : vector<16x128xi32>
    %c0_i32_2 = arith.constant 0 : i32
    %8 = vector.broadcast %c0_i32_2 : i32 to vector<16x128xi32>
    %9 = arith.cmpi slt, %5, %8 : vector<16x128xi32>
    %c0_i32_3 = arith.constant 0 : i32
    %10 = arith.cmpi slt, %3, %c0_i32_3 : i32
    %11 = vector.broadcast %10 : i1 to vector<16x128xi1>
    %12 = vector.broadcast %11 : vector<16x128xi1> to vector<16x128xi1>
    %13 = arith.xori %9, %12 : vector<16x128xi1>
    %14 = arith.andi %13, %7 : vector<16x128xi1>
    %15 = vector.broadcast %3 : i32 to vector<16x128xi32>
    %16 = arith.addi %5, %15 : vector<16x128xi32>
    %17 = arith.select %14, %16, %5 : vector<16x128xi1>, vector<16x128xi32>
    %18 = tpu.iota {dimensions = array<i32: 1>} : vector<16x128xi32>
    %c16_i32_4 = arith.constant 16 : i32
    %c0_i32_5 = arith.constant 0 : i32
    %19 = arith.cmpi eq, %c16_i32_4, %c0_i32_5 : i32
    %c1_i32_6 = arith.constant 1 : i32
    %20 = arith.select %19, %c1_i32_6, %c16_i32_4 : i32
    %21 = vector.broadcast %20 : i32 to vector<16x128xi32>
    %22 = arith.remsi %18, %21 : vector<16x128xi32>
    %c0_i32_7 = arith.constant 0 : i32
    %23 = vector.broadcast %c0_i32_7 : i32 to vector<16x128xi32>
    %24 = arith.cmpi ne, %22, %23 : vector<16x128xi32>
    %c0_i32_8 = arith.constant 0 : i32
    %25 = vector.broadcast %c0_i32_8 : i32 to vector<16x128xi32>
    %26 = arith.cmpi slt, %22, %25 : vector<16x128xi32>
    %c0_i32_9 = arith.constant 0 : i32
    %27 = arith.cmpi slt, %20, %c0_i32_9 : i32
    %28 = vector.broadcast %27 : i1 to vector<16x128xi1>
    %29 = vector.broadcast %28 : vector<16x128xi1> to vector<16x128xi1>
    %30 = arith.xori %26, %29 : vector<16x128xi1>
    %31 = arith.andi %30, %24 : vector<16x128xi1>
    %32 = vector.broadcast %20 : i32 to vector<16x128xi32>
    %33 = arith.addi %22, %32 : vector<16x128xi32>
    %34 = arith.select %31, %33, %22 : vector<16x128xi1>, vector<16x128xi32>
    %c1_i32_10 = arith.constant 1 : i32
    %35 = vector.broadcast %c1_i32_10 : i32 to vector<16x128xi32>
    %36 = arith.cmpi sge, %17, %35 : vector<16x128xi32>
    %c15_i32 = arith.constant 15 : i32
    %37 = vector.broadcast %c15_i32 : i32 to vector<16x128xi32>
    %38 = arith.cmpi slt, %17, %37 : vector<16x128xi32>
    %c1_i32_11 = arith.constant 1 : i32
    %39 = vector.broadcast %c1_i32_11 : i32 to vector<16x128xi32>
    %40 = arith.cmpi sge, %34, %39 : vector<16x128xi32>
    %c127_i32 = arith.constant 127 : i32
    %41 = tpu.dynamic_rotate %0 by %c127_i32 dim 1 : vector<16x128xf32>, i32 -> vector<16x128xf32>
    %c15_i32_12 = arith.constant 15 : i32
    %42 = vector.broadcast %c15_i32_12 : i32 to vector<16x128xi32>
    %43 = arith.cmpi slt, %34, %42 : vector<16x128xi32>
    %cst = arith.constant 0.000000e+00 : f32
    %44 = vector.broadcast %cst : f32 to vector<16x128xf32>
    %45 = arith.select %43, %41, %44 : vector<16x128xi1>, vector<16x128xf32>
    %c1_i32_13 = arith.constant 1 : i32
    %46 = tpu.dynamic_rotate %45 by %c1_i32_13 dim 0 : vector<16x128xf32>, i32 -> vector<16x128xf32>
    %cst_14 = arith.constant 0.000000e+00 : f32
    %47 = vector.broadcast %cst_14 : f32 to vector<16x128xf32>
    %48 = arith.select %36, %46, %47 : vector<16x128xi1>, vector<16x128xf32>
    %49 = arith.addf %48, %0 : vector<16x128xf32>
    %c1_i32_15 = arith.constant 1 : i32
    %50 = tpu.dynamic_rotate %49 by %c1_i32_15 dim 1 : vector<16x128xf32>, i32 -> vector<16x128xf32>
    %cst_16 = arith.constant 0.000000e+00 : f32
    %51 = vector.broadcast %cst_16 : f32 to vector<16x128xf32>
    %52 = arith.select %40, %50, %51 : vector<16x128xi1>, vector<16x128xf32>
    %53 = arith.subf %49, %52 : vector<16x128xf32>
    %c1_i32_17 = arith.constant 1 : i32
    %54 = tpu.dynamic_rotate %53 by %c1_i32_17 dim 0 : vector<16x128xf32>, i32 -> vector<16x128xf32>
    %55 = arith.select %36, %54, %53 : vector<16x128xi1>, vector<16x128xf32>
    %c15_i32_18 = arith.constant 15 : i32
    %56 = tpu.dynamic_rotate %53 by %c15_i32_18 dim 0 : vector<16x128xf32>, i32 -> vector<16x128xf32>
    %57 = arith.select %38, %56, %53 : vector<16x128xi1>, vector<16x128xf32>
    %58 = arith.maximumf %53, %55 : vector<16x128xf32>
    %59 = arith.maximumf %58, %57 : vector<16x128xf32>
    %60 = arith.minimumf %53, %55 : vector<16x128xf32>
    %61 = arith.minimumf %60, %57 : vector<16x128xf32>
    %cst_19 = arith.constant 0.000000e+00 : f32
    %62 = vector.broadcast %cst_19 : f32 to vector<16x128xf32>
    %63 = arith.maximumf %53, %62 : vector<16x128xf32>
    %cst_20 = arith.constant 0.000000e+00 : f32
    %64 = vector.broadcast %cst_20 : f32 to vector<16x128xf32>
    %65 = arith.subf %64, %53 : vector<16x128xf32>
    %cst_21 = arith.constant 0.000000e+00 : f32
    %66 = vector.broadcast %cst_21 : f32 to vector<16x128xf32>
    %67 = arith.maximumf %65, %66 : vector<16x128xf32>
    %68 = arith.cmpf oeq, %59, %53 : vector<16x128xf32>
    %cst_22 = arith.constant 0.000000e+00 : f32
    %69 = vector.broadcast %cst_22 : f32 to vector<16x128xf32>
    %70 = arith.select %68, %63, %69 : vector<16x128xi1>, vector<16x128xf32>
    %71 = arith.cmpf oeq, %61, %53 : vector<16x128xf32>
    %cst_23 = arith.constant 0.000000e+00 : f32
    %72 = vector.broadcast %cst_23 : f32 to vector<16x128xf32>
    %73 = arith.select %71, %67, %72 : vector<16x128xi1>, vector<16x128xf32>
    %c0_24 = arith.constant 0 : index
    %c0_25 = arith.constant 0 : index
    %74 = vector.load %arg2[%c0_24, %c0_25] : memref<16x2048xf32, #tpu.memory_space<vmem>>, vector<16x128xf32>
    tpu.vector_store %arg2[%c0_24, %c0_25], %70 {strides = array<i32>} : memref<16x2048xf32, #tpu.memory_space<vmem>>, vector<16x128xf32>,
    %c0_26 = arith.constant 0 : index
    %c512 = arith.constant 512 : index
    %75 = vector.load %arg2[%c0_26, %c512] : memref<16x2048xf32, #tpu.memory_space<vmem>>, vector<16x128xf32>
    tpu.vector_store %arg2[%c0_26, %c512], %73 {strides = array<i32>} : memref<16x2048xf32, #tpu.memory_space<vmem>>, vector<16x128xf32>,
    %76 = arith.maximumf %70, %73 : vector<16x128xf32>
    %77 = arith.addf %48, %45 : vector<16x128xf32>
    %c15_i32_27 = arith.constant 15 : i32
    %78 = tpu.dynamic_rotate %45 by %c15_i32_27 dim 0 : vector<16x128xf32>, i32 -> vector<16x128xf32>
    %cst_28 = arith.constant 0.000000e+00 : f32
    %79 = vector.broadcast %cst_28 : f32 to vector<16x128xf32>
    %80 = arith.select %38, %78, %79 : vector<16x128xi1>, vector<16x128xf32>
    %81 = arith.addf %77, %80 : vector<16x128xf32>
    %c1_i32_29 = arith.constant 1 : i32
    %82 = tpu.dynamic_rotate %81 by %c1_i32_29 dim 1 : vector<16x128xf32>, i32 -> vector<16x128xf32>
    %cst_30 = arith.constant 0.000000e+00 : f32
    %83 = vector.broadcast %cst_30 : f32 to vector<16x128xf32>
    %84 = arith.select %40, %82, %83 : vector<16x128xi1>, vector<16x128xf32>
    %85 = arith.subf %81, %84 : vector<16x128xf32>
    %c1_i32_31 = arith.constant 1 : i32
    %86 = tpu.dynamic_rotate %85 by %c1_i32_31 dim 0 : vector<16x128xf32>, i32 -> vector<16x128xf32>
    %87 = arith.select %36, %86, %85 : vector<16x128xi1>, vector<16x128xf32>
    %c15_i32_32 = arith.constant 15 : i32
    %88 = tpu.dynamic_rotate %85 by %c15_i32_32 dim 0 : vector<16x128xf32>, i32 -> vector<16x128xf32>
    %89 = arith.select %38, %88, %85 : vector<16x128xi1>, vector<16x128xf32>
    %90 = arith.maximumf %85, %87 : vector<16x128xf32>
    %91 = arith.maximumf %90, %89 : vector<16x128xf32>
    %92 = arith.minimumf %85, %87 : vector<16x128xf32>
    %93 = arith.minimumf %92, %89 : vector<16x128xf32>
    %cst_33 = arith.constant 0.000000e+00 : f32
    %94 = vector.broadcast %cst_33 : f32 to vector<16x128xf32>
    %95 = arith.maximumf %85, %94 : vector<16x128xf32>
    %cst_34 = arith.constant 0.000000e+00 : f32
    %96 = vector.broadcast %cst_34 : f32 to vector<16x128xf32>
    %97 = arith.subf %96, %85 : vector<16x128xf32>
    %cst_35 = arith.constant 0.000000e+00 : f32
    %98 = vector.broadcast %cst_35 : f32 to vector<16x128xf32>
    %99 = arith.maximumf %97, %98 : vector<16x128xf32>
    %100 = arith.cmpf oeq, %91, %85 : vector<16x128xf32>
    %cst_36 = arith.constant 0.000000e+00 : f32
    %101 = vector.broadcast %cst_36 : f32 to vector<16x128xf32>
    %102 = arith.select %100, %95, %101 : vector<16x128xi1>, vector<16x128xf32>
    %103 = arith.cmpf oeq, %93, %85 : vector<16x128xf32>
    %cst_37 = arith.constant 0.000000e+00 : f32
    %104 = vector.broadcast %cst_37 : f32 to vector<16x128xf32>
    %105 = arith.select %103, %99, %104 : vector<16x128xi1>, vector<16x128xf32>
    %c0_38 = arith.constant 0 : index
    %c128 = arith.constant 128 : index
    %106 = vector.load %arg2[%c0_38, %c128] : memref<16x2048xf32, #tpu.memory_space<vmem>>, vector<16x128xf32>
    tpu.vector_store %arg2[%c0_38, %c128], %102 {strides = array<i32>} : memref<16x2048xf32, #tpu.memory_space<vmem>>, vector<16x128xf32>,
    %c0_39 = arith.constant 0 : index
    %c640 = arith.constant 640 : index
    %107 = vector.load %arg2[%c0_39, %c640] : memref<16x2048xf32, #tpu.memory_space<vmem>>, vector<16x128xf32>
    tpu.vector_store %arg2[%c0_39, %c640], %105 {strides = array<i32>} : memref<16x2048xf32, #tpu.memory_space<vmem>>, vector<16x128xf32>,
    %108 = arith.maximumf %102, %105 : vector<16x128xf32>
    %109 = arith.maximumf %76, %108 : vector<16x128xf32>
    %c1_i32_40 = arith.constant 1 : i32
    %110 = tpu.dynamic_rotate %0 by %c1_i32_40 dim 1 : vector<16x128xf32>, i32 -> vector<16x128xf32>
    %cst_41 = arith.constant 0.000000e+00 : f32
    %111 = vector.broadcast %cst_41 : f32 to vector<16x128xf32>
    %112 = arith.select %40, %110, %111 : vector<16x128xi1>, vector<16x128xf32>
    %c1_i32_42 = arith.constant 1 : i32
    %113 = tpu.dynamic_rotate %112 by %c1_i32_42 dim 0 : vector<16x128xf32>, i32 -> vector<16x128xf32>
    %cst_43 = arith.constant 0.000000e+00 : f32
    %114 = vector.broadcast %cst_43 : f32 to vector<16x128xf32>
    %115 = arith.select %36, %113, %114 : vector<16x128xi1>, vector<16x128xf32>
    %116 = arith.addf %115, %0 : vector<16x128xf32>
    %c1_i32_44 = arith.constant 1 : i32
    %117 = tpu.dynamic_rotate %116 by %c1_i32_44 dim 1 : vector<16x128xf32>, i32 -> vector<16x128xf32>
    %cst_45 = arith.constant 0.000000e+00 : f32
    %118 = vector.broadcast %cst_45 : f32 to vector<16x128xf32>
    %119 = arith.select %40, %117, %118 : vector<16x128xi1>, vector<16x128xf32>
    %120 = arith.subf %116, %119 : vector<16x128xf32>
    %c1_i32_46 = arith.constant 1 : i32
    %121 = tpu.dynamic_rotate %120 by %c1_i32_46 dim 0 : vector<16x128xf32>, i32 -> vector<16x128xf32>
    %122 = arith.select %36, %121, %120 : vector<16x128xi1>, vector<16x128xf32>
    %c15_i32_47 = arith.constant 15 : i32
    %123 = tpu.dynamic_rotate %120 by %c15_i32_47 dim 0 : vector<16x128xf32>, i32 -> vector<16x128xf32>
    %124 = arith.select %38, %123, %120 : vector<16x128xi1>, vector<16x128xf32>
    %125 = arith.maximumf %120, %122 : vector<16x128xf32>
    %126 = arith.maximumf %125, %124 : vector<16x128xf32>
    %127 = arith.minimumf %120, %122 : vector<16x128xf32>
    %128 = arith.minimumf %127, %124 : vector<16x128xf32>
    %cst_48 = arith.constant 0.000000e+00 : f32
    %129 = vector.broadcast %cst_48 : f32 to vector<16x128xf32>
    %130 = arith.maximumf %120, %129 : vector<16x128xf32>
    %cst_49 = arith.constant 0.000000e+00 : f32
    %131 = vector.broadcast %cst_49 : f32 to vector<16x128xf32>
    %132 = arith.subf %131, %120 : vector<16x128xf32>
    %cst_50 = arith.constant 0.000000e+00 : f32
    %133 = vector.broadcast %cst_50 : f32 to vector<16x128xf32>
    %134 = arith.maximumf %132, %133 : vector<16x128xf32>
    %135 = arith.cmpf oeq, %126, %120 : vector<16x128xf32>
    %cst_51 = arith.constant 0.000000e+00 : f32
    %136 = vector.broadcast %cst_51 : f32 to vector<16x128xf32>
    %137 = arith.select %135, %130, %136 : vector<16x128xi1>, vector<16x128xf32>
    %138 = arith.cmpf oeq, %128, %120 : vector<16x128xf32>
    %cst_52 = arith.constant 0.000000e+00 : f32
    %139 = vector.broadcast %cst_52 : f32 to vector<16x128xf32>
    %140 = arith.select %138, %134, %139 : vector<16x128xi1>, vector<16x128xf32>
    %c0_53 = arith.constant 0 : index
    %c256 = arith.constant 256 : index
    %141 = vector.load %arg2[%c0_53, %c256] : memref<16x2048xf32, #tpu.memory_space<vmem>>, vector<16x128xf32>
    tpu.vector_store %arg2[%c0_53, %c256], %137 {strides = array<i32>} : memref<16x2048xf32, #tpu.memory_space<vmem>>, vector<16x128xf32>,
    %c0_54 = arith.constant 0 : index
    %c768 = arith.constant 768 : index
    %142 = vector.load %arg2[%c0_54, %c768] : memref<16x2048xf32, #tpu.memory_space<vmem>>, vector<16x128xf32>
    tpu.vector_store %arg2[%c0_54, %c768], %140 {strides = array<i32>} : memref<16x2048xf32, #tpu.memory_space<vmem>>, vector<16x128xf32>,
    %143 = arith.maximumf %137, %140 : vector<16x128xf32>
    %144 = arith.maximumf %109, %143 : vector<16x128xf32>
    %145 = arith.addf %115, %0 : vector<16x128xf32>
    %146 = arith.addf %145, %80 : vector<16x128xf32>
    %c1_i32_55 = arith.constant 1 : i32
    %147 = tpu.dynamic_rotate %146 by %c1_i32_55 dim 1 : vector<16x128xf32>, i32 -> vector<16x128xf32>
    %cst_56 = arith.constant 0.000000e+00 : f32
    %148 = vector.broadcast %cst_56 : f32 to vector<16x128xf32>
    %149 = arith.select %40, %147, %148 : vector<16x128xi1>, vector<16x128xf32>
    %150 = arith.subf %146, %149 : vector<16x128xf32>
    %c1_i32_57 = arith.constant 1 : i32
    %151 = tpu.dynamic_rotate %150 by %c1_i32_57 dim 0 : vector<16x128xf32>, i32 -> vector<16x128xf32>
    %152 = arith.select %36, %151, %150 : vector<16x128xi1>, vector<16x128xf32>
    %c15_i32_58 = arith.constant 15 : i32
    %153 = tpu.dynamic_rotate %150 by %c15_i32_58 dim 0 : vector<16x128xf32>, i32 -> vector<16x128xf32>
    %154 = arith.select %38, %153, %150 : vector<16x128xi1>, vector<16x128xf32>
    %155 = arith.maximumf %150, %152 : vector<16x128xf32>
    %156 = arith.maximumf %155, %154 : vector<16x128xf32>
    %157 = arith.minimumf %150, %152 : vector<16x128xf32>
    %158 = arith.minimumf %157, %154 : vector<16x128xf32>
    %cst_59 = arith.constant 0.000000e+00 : f32
    %159 = vector.broadcast %cst_59 : f32 to vector<16x128xf32>
    %160 = arith.maximumf %150, %159 : vector<16x128xf32>
    %cst_60 = arith.constant 0.000000e+00 : f32
    %161 = vector.broadcast %cst_60 : f32 to vector<16x128xf32>
    %162 = arith.subf %161, %150 : vector<16x128xf32>
    %cst_61 = arith.constant 0.000000e+00 : f32
    %163 = vector.broadcast %cst_61 : f32 to vector<16x128xf32>
    %164 = arith.maximumf %162, %163 : vector<16x128xf32>
    %165 = arith.cmpf oeq, %156, %150 : vector<16x128xf32>
    %cst_62 = arith.constant 0.000000e+00 : f32
    %166 = vector.broadcast %cst_62 : f32 to vector<16x128xf32>
    %167 = arith.select %165, %160, %166 : vector<16x128xi1>, vector<16x128xf32>
    %168 = arith.cmpf oeq, %158, %150 : vector<16x128xf32>
    %cst_63 = arith.constant 0.000000e+00 : f32
    %169 = vector.broadcast %cst_63 : f32 to vector<16x128xf32>
    %170 = arith.select %168, %164, %169 : vector<16x128xi1>, vector<16x128xf32>
    %c0_64 = arith.constant 0 : index
    %c384 = arith.constant 384 : index
    %171 = vector.load %arg2[%c0_64, %c384] : memref<16x2048xf32, #tpu.memory_space<vmem>>, vector<16x128xf32>
    tpu.vector_store %arg2[%c0_64, %c384], %167 {strides = array<i32>} : memref<16x2048xf32, #tpu.memory_space<vmem>>, vector<16x128xf32>,
    %c0_65 = arith.constant 0 : index
    %c896 = arith.constant 896 : index
    %172 = vector.load %arg2[%c0_65, %c896] : memref<16x2048xf32, #tpu.memory_space<vmem>>, vector<16x128xf32>
    tpu.vector_store %arg2[%c0_65, %c896], %170 {strides = array<i32>} : memref<16x2048xf32, #tpu.memory_space<vmem>>, vector<16x128xf32>,
    %173 = arith.maximumf %167, %170 : vector<16x128xf32>
    %174 = arith.maximumf %144, %173 : vector<16x128xf32>
    %c15_i32_66 = arith.constant 15 : i32
    %175 = tpu.dynamic_rotate %112 by %c15_i32_66 dim 0 : vector<16x128xf32>, i32 -> vector<16x128xf32>
    %cst_67 = arith.constant 0.000000e+00 : f32
    %176 = vector.broadcast %cst_67 : f32 to vector<16x128xf32>
    %177 = arith.select %38, %175, %176 : vector<16x128xi1>, vector<16x128xf32>
    %178 = arith.addf %0, %177 : vector<16x128xf32>
    %c1_i32_68 = arith.constant 1 : i32
    %179 = tpu.dynamic_rotate %178 by %c1_i32_68 dim 0 : vector<16x128xf32>, i32 -> vector<16x128xf32>
    %cst_69 = arith.constant 0.000000e+00 : f32
    %180 = vector.broadcast %cst_69 : f32 to vector<16x128xf32>
    %181 = arith.select %36, %179, %180 : vector<16x128xi1>, vector<16x128xf32>
    %182 = arith.subf %178, %181 : vector<16x128xf32>
    %c1_i32_70 = arith.constant 1 : i32
    %183 = tpu.dynamic_rotate %182 by %c1_i32_70 dim 0 : vector<16x128xf32>, i32 -> vector<16x128xf32>
    %184 = arith.select %36, %183, %182 : vector<16x128xi1>, vector<16x128xf32>
    %c15_i32_71 = arith.constant 15 : i32
    %185 = tpu.dynamic_rotate %182 by %c15_i32_71 dim 0 : vector<16x128xf32>, i32 -> vector<16x128xf32>
    %186 = arith.select %38, %185, %182 : vector<16x128xi1>, vector<16x128xf32>
    %187 = arith.maximumf %182, %184 : vector<16x128xf32>
    %188 = arith.maximumf %187, %186 : vector<16x128xf32>
    %189 = arith.minimumf %182, %184 : vector<16x128xf32>
    %190 = arith.minimumf %189, %186 : vector<16x128xf32>
    %cst_72 = arith.constant 0.000000e+00 : f32
    %191 = vector.broadcast %cst_72 : f32 to vector<16x128xf32>
    %192 = arith.maximumf %182, %191 : vector<16x128xf32>
    %cst_73 = arith.constant 0.000000e+00 : f32
    %193 = vector.broadcast %cst_73 : f32 to vector<16x128xf32>
    %194 = arith.subf %193, %182 : vector<16x128xf32>
    %cst_74 = arith.constant 0.000000e+00 : f32
    %195 = vector.broadcast %cst_74 : f32 to vector<16x128xf32>
    %196 = arith.maximumf %194, %195 : vector<16x128xf32>
    %197 = arith.cmpf oeq, %188, %182 : vector<16x128xf32>
    %cst_75 = arith.constant 0.000000e+00 : f32
    %198 = vector.broadcast %cst_75 : f32 to vector<16x128xf32>
    %199 = arith.select %197, %192, %198 : vector<16x128xi1>, vector<16x128xf32>
    %200 = arith.cmpf oeq, %190, %182 : vector<16x128xf32>
    %cst_76 = arith.constant 0.000000e+00 : f32
    %201 = vector.broadcast %cst_76 : f32 to vector<16x128xf32>
    %202 = arith.select %200, %196, %201 : vector<16x128xi1>, vector<16x128xf32>
    %c0_77 = arith.constant 0 : index
    %c1024 = arith.constant 1024 : index
    %203 = vector.load %arg2[%c0_77, %c1024] : memref<16x2048xf32, #tpu.memory_space<vmem>>, vector<16x128xf32>
    tpu.vector_store %arg2[%c0_77, %c1024], %199 {strides = array<i32>} : memref<16x2048xf32, #tpu.memory_space<vmem>>, vector<16x128xf32>,
    %c0_78 = arith.constant 0 : index
    %c1536 = arith.constant 1536 : index
    %204 = vector.load %arg2[%c0_78, %c1536] : memref<16x2048xf32, #tpu.memory_space<vmem>>, vector<16x128xf32>
    tpu.vector_store %arg2[%c0_78, %c1536], %202 {strides = array<i32>} : memref<16x2048xf32, #tpu.memory_space<vmem>>, vector<16x128xf32>,
    %205 = arith.maximumf %199, %202 : vector<16x128xf32>
    %206 = arith.maximumf %174, %205 : vector<16x128xf32>
    %c15_i32_79 = arith.constant 15 : i32
    %207 = tpu.dynamic_rotate %0 by %c15_i32_79 dim 0 : vector<16x128xf32>, i32 -> vector<16x128xf32>
    %cst_80 = arith.constant 0.000000e+00 : f32
    %208 = vector.broadcast %cst_80 : f32 to vector<16x128xf32>
    %209 = arith.select %38, %207, %208 : vector<16x128xi1>, vector<16x128xf32>
    %210 = arith.addf %177, %209 : vector<16x128xf32>
    %211 = arith.addf %210, %80 : vector<16x128xf32>
    %c1_i32_81 = arith.constant 1 : i32
    %212 = tpu.dynamic_rotate %211 by %c1_i32_81 dim 0 : vector<16x128xf32>, i32 -> vector<16x128xf32>
    %cst_82 = arith.constant 0.000000e+00 : f32
    %213 = vector.broadcast %cst_82 : f32 to vector<16x128xf32>
    %214 = arith.select %36, %212, %213 : vector<16x128xi1>, vector<16x128xf32>
    %215 = arith.subf %211, %214 : vector<16x128xf32>
    %c1_i32_83 = arith.constant 1 : i32
    %216 = tpu.dynamic_rotate %215 by %c1_i32_83 dim 0 : vector<16x128xf32>, i32 -> vector<16x128xf32>
    %217 = arith.select %36, %216, %215 : vector<16x128xi1>, vector<16x128xf32>
    %c15_i32_84 = arith.constant 15 : i32
    %218 = tpu.dynamic_rotate %215 by %c15_i32_84 dim 0 : vector<16x128xf32>, i32 -> vector<16x128xf32>
    %219 = arith.select %38, %218, %215 : vector<16x128xi1>, vector<16x128xf32>
    %220 = arith.maximumf %215, %217 : vector<16x128xf32>
    %221 = arith.maximumf %220, %219 : vector<16x128xf32>
    %222 = arith.minimumf %215, %217 : vector<16x128xf32>
    %223 = arith.minimumf %222, %219 : vector<16x128xf32>
    %cst_85 = arith.constant 0.000000e+00 : f32
    %224 = vector.broadcast %cst_85 : f32 to vector<16x128xf32>
    %225 = arith.maximumf %215, %224 : vector<16x128xf32>
    %cst_86 = arith.constant 0.000000e+00 : f32
    %226 = vector.broadcast %cst_86 : f32 to vector<16x128xf32>
    %227 = arith.subf %226, %215 : vector<16x128xf32>
    %cst_87 = arith.constant 0.000000e+00 : f32
    %228 = vector.broadcast %cst_87 : f32 to vector<16x128xf32>
    %229 = arith.maximumf %227, %228 : vector<16x128xf32>
    %230 = arith.cmpf oeq, %221, %215 : vector<16x128xf32>
    %cst_88 = arith.constant 0.000000e+00 : f32
    %231 = vector.broadcast %cst_88 : f32 to vector<16x128xf32>
    %232 = arith.select %230, %225, %231 : vector<16x128xi1>, vector<16x128xf32>
    %233 = arith.cmpf oeq, %223, %215 : vector<16x128xf32>
    %cst_89 = arith.constant 0.000000e+00 : f32
    %234 = vector.broadcast %cst_89 : f32 to vector<16x128xf32>
    %235 = arith.select %233, %229, %234 : vector<16x128xi1>, vector<16x128xf32>
    %c0_90 = arith.constant 0 : index
    %c1152 = arith.constant 1152 : index
    %236 = vector.load %arg2[%c0_90, %c1152] : memref<16x2048xf32, #tpu.memory_space<vmem>>, vector<16x128xf32>
    tpu.vector_store %arg2[%c0_90, %c1152], %232 {strides = array<i32>} : memref<16x2048xf32, #tpu.memory_space<vmem>>, vector<16x128xf32>,
    %c0_91 = arith.constant 0 : index
    %c1664 = arith.constant 1664 : index
    %237 = vector.load %arg2[%c0_91, %c1664] : memref<16x2048xf32, #tpu.memory_space<vmem>>, vector<16x128xf32>
    tpu.vector_store %arg2[%c0_91, %c1664], %235 {strides = array<i32>} : memref<16x2048xf32, #tpu.memory_space<vmem>>, vector<16x128xf32>,
    %238 = arith.maximumf %232, %235 : vector<16x128xf32>
    %239 = arith.maximumf %206, %238 : vector<16x128xf32>
    %240 = arith.addf %115, %0 : vector<16x128xf32>
    %c1_i32_92 = arith.constant 1 : i32
    %241 = tpu.dynamic_rotate %240 by %c1_i32_92 dim 0 : vector<16x128xf32>, i32 -> vector<16x128xf32>
    %cst_93 = arith.constant 0.000000e+00 : f32
    %242 = vector.broadcast %cst_93 : f32 to vector<16x128xf32>
    %243 = arith.select %36, %241, %242 : vector<16x128xi1>, vector<16x128xf32>
    %244 = arith.subf %240, %243 : vector<16x128xf32>
    %c1_i32_94 = arith.constant 1 : i32
    %245 = tpu.dynamic_rotate %244 by %c1_i32_94 dim 0 : vector<16x128xf32>, i32 -> vector<16x128xf32>
    %246 = arith.select %36, %245, %244 : vector<16x128xi1>, vector<16x128xf32>
    %c15_i32_95 = arith.constant 15 : i32
    %247 = tpu.dynamic_rotate %244 by %c15_i32_95 dim 0 : vector<16x128xf32>, i32 -> vector<16x128xf32>
    %248 = arith.select %38, %247, %244 : vector<16x128xi1>, vector<16x128xf32>
    %249 = arith.maximumf %244, %246 : vector<16x128xf32>
    %250 = arith.maximumf %249, %248 : vector<16x128xf32>
    %251 = arith.minimumf %244, %246 : vector<16x128xf32>
    %252 = arith.minimumf %251, %248 : vector<16x128xf32>
    %cst_96 = arith.constant 0.000000e+00 : f32
    %253 = vector.broadcast %cst_96 : f32 to vector<16x128xf32>
    %254 = arith.maximumf %244, %253 : vector<16x128xf32>
    %cst_97 = arith.constant 0.000000e+00 : f32
    %255 = vector.broadcast %cst_97 : f32 to vector<16x128xf32>
    %256 = arith.subf %255, %244 : vector<16x128xf32>
    %cst_98 = arith.constant 0.000000e+00 : f32
    %257 = vector.broadcast %cst_98 : f32 to vector<16x128xf32>
    %258 = arith.maximumf %256, %257 : vector<16x128xf32>
    %259 = arith.cmpf oeq, %250, %244 : vector<16x128xf32>
    %cst_99 = arith.constant 0.000000e+00 : f32
    %260 = vector.broadcast %cst_99 : f32 to vector<16x128xf32>
    %261 = arith.select %259, %254, %260 : vector<16x128xi1>, vector<16x128xf32>
    %262 = arith.cmpf oeq, %252, %244 : vector<16x128xf32>
    %cst_100 = arith.constant 0.000000e+00 : f32
    %263 = vector.broadcast %cst_100 : f32 to vector<16x128xf32>
    %264 = arith.select %262, %258, %263 : vector<16x128xi1>, vector<16x128xf32>
    %c0_101 = arith.constant 0 : index
    %c1280 = arith.constant 1280 : index
    %265 = vector.load %arg2[%c0_101, %c1280] : memref<16x2048xf32, #tpu.memory_space<vmem>>, vector<16x128xf32>
    tpu.vector_store %arg2[%c0_101, %c1280], %261 {strides = array<i32>} : memref<16x2048xf32, #tpu.memory_space<vmem>>, vector<16x128xf32>,
    %c0_102 = arith.constant 0 : index
    %c1792 = arith.constant 1792 : index
    %266 = vector.load %arg2[%c0_102, %c1792] : memref<16x2048xf32, #tpu.memory_space<vmem>>, vector<16x128xf32>
    tpu.vector_store %arg2[%c0_102, %c1792], %264 {strides = array<i32>} : memref<16x2048xf32, #tpu.memory_space<vmem>>, vector<16x128xf32>,
    %267 = arith.maximumf %261, %264 : vector<16x128xf32>
    %268 = arith.maximumf %239, %267 : vector<16x128xf32>
    %269 = arith.addf %115, %0 : vector<16x128xf32>
    %270 = arith.addf %269, %80 : vector<16x128xf32>
    %c1_i32_103 = arith.constant 1 : i32
    %271 = tpu.dynamic_rotate %270 by %c1_i32_103 dim 0 : vector<16x128xf32>, i32 -> vector<16x128xf32>
    %cst_104 = arith.constant 0.000000e+00 : f32
    %272 = vector.broadcast %cst_104 : f32 to vector<16x128xf32>
    %273 = arith.select %36, %271, %272 : vector<16x128xi1>, vector<16x128xf32>
    %274 = arith.subf %270, %273 : vector<16x128xf32>
    %c1_i32_105 = arith.constant 1 : i32
    %275 = tpu.dynamic_rotate %274 by %c1_i32_105 dim 0 : vector<16x128xf32>, i32 -> vector<16x128xf32>
    %276 = arith.select %36, %275, %274 : vector<16x128xi1>, vector<16x128xf32>
    %c15_i32_106 = arith.constant 15 : i32
    %277 = tpu.dynamic_rotate %274 by %c15_i32_106 dim 0 : vector<16x128xf32>, i32 -> vector<16x128xf32>
    %278 = arith.select %38, %277, %274 : vector<16x128xi1>, vector<16x128xf32>
    %279 = arith.maximumf %274, %276 : vector<16x128xf32>
    %280 = arith.maximumf %279, %278 : vector<16x128xf32>
    %281 = arith.minimumf %274, %276 : vector<16x128xf32>
    %282 = arith.minimumf %281, %278 : vector<16x128xf32>
    %cst_107 = arith.constant 0.000000e+00 : f32
    %283 = vector.broadcast %cst_107 : f32 to vector<16x128xf32>
    %284 = arith.maximumf %274, %283 : vector<16x128xf32>
    %cst_108 = arith.constant 0.000000e+00 : f32
    %285 = vector.broadcast %cst_108 : f32 to vector<16x128xf32>
    %286 = arith.subf %285, %274 : vector<16x128xf32>
    %cst_109 = arith.constant 0.000000e+00 : f32
    %287 = vector.broadcast %cst_109 : f32 to vector<16x128xf32>
    %288 = arith.maximumf %286, %287 : vector<16x128xf32>
    %289 = arith.cmpf oeq, %280, %274 : vector<16x128xf32>
    %cst_110 = arith.constant 0.000000e+00 : f32
    %290 = vector.broadcast %cst_110 : f32 to vector<16x128xf32>
    %291 = arith.select %289, %284, %290 : vector<16x128xi1>, vector<16x128xf32>
    %292 = arith.cmpf oeq, %282, %274 : vector<16x128xf32>
    %cst_111 = arith.constant 0.000000e+00 : f32
    %293 = vector.broadcast %cst_111 : f32 to vector<16x128xf32>
    %294 = arith.select %292, %288, %293 : vector<16x128xi1>, vector<16x128xf32>
    %c0_112 = arith.constant 0 : index
    %c1408 = arith.constant 1408 : index
    %295 = vector.load %arg2[%c0_112, %c1408] : memref<16x2048xf32, #tpu.memory_space<vmem>>, vector<16x128xf32>
    tpu.vector_store %arg2[%c0_112, %c1408], %291 {strides = array<i32>} : memref<16x2048xf32, #tpu.memory_space<vmem>>, vector<16x128xf32>,
    %c0_113 = arith.constant 0 : index
    %c1920 = arith.constant 1920 : index
    %296 = vector.load %arg2[%c0_113, %c1920] : memref<16x2048xf32, #tpu.memory_space<vmem>>, vector<16x128xf32>
    tpu.vector_store %arg2[%c0_113, %c1920], %294 {strides = array<i32>} : memref<16x2048xf32, #tpu.memory_space<vmem>>, vector<16x128xf32>,
    %297 = arith.maximumf %291, %294 : vector<16x128xf32>
    %298 = arith.maximumf %268, %297 : vector<16x128xf32>
    %c0_114 = arith.constant 0 : index
    %c0_115 = arith.constant 0 : index
    %299 = vector.load %arg3[%c0_114, %c0_115] : memref<16x128xf32, #tpu.memory_space<vmem>>, vector<16x128xf32>
    tpu.vector_store %arg3[%c0_114, %c0_115], %298 {strides = array<i32>} : memref<16x128xf32, #tpu.memory_space<vmem>>, vector<16x128xf32>,
    return
  }
  func.func @transform_0(%arg0: i32) -> (i32, i32) {
    %c0_i32 = arith.constant 0 : i32
    %c0_i32_0 = arith.constant 0 : i32
    return %arg0, %c0_i32 : i32, i32
  }
  func.func @transform_1(%arg0: i32) -> (i32, i32) {
    %c0_i32 = arith.constant 0 : i32
    %c0_i32_0 = arith.constant 0 : i32
    return %arg0, %c0_i32 : i32, i32
  }
  func.func @transform_2(%arg0: i32) -> (i32, i32) {
    %c0_i32 = arith.constant 0 : i32
    %c0_i32_0 = arith.constant 0 : i32
    return %arg0, %c0_i32 : i32, i32
  }
}

</mosaic_0001>

<llo_original>
// kernel: get_informative_packed.1
$region0: #{get_informative_packed.1}
  #allocation0 [shape = 'u32[]', space=smem, size = 0x4, offset = 0x4, fixed_abs, tag = 'smem constant byte address 0x4 - core index']
  #allocation1 [shape = 'u32[72,128]{1,0:T(1,128)}', space=vmem, size = 0x9000, scoped, tag = 'internal scratch']
  %s0 = inlined_call_operand.vmem [shape: f32[32,128], index: 0, kind: input, shape index: {}]
  %s1 = inlined_call_operand.hbm [shape: f32[32,2048], index: 1, kind: output, shape index: {0}]
  %s2 = inlined_call_operand.hbm [shape: f32[32,128], index: 2, kind: output, shape index: {1}]
  %3 = xla_tuple %s1, %s2
  %s4 = sld [smem:[#allocation0]]
  $region45: #{get_informative_packed.1} parent=0
    _
  %s6 = ssub.s32 1, %s4
  %s7 = scalar_select 0, %s6, %s4
  $region1: #{get_informative_packed.1} parent=0
    #allocation2 [shape = 'u8[262144]{0}', space=vmem, size = 0x40000, scoped, tag = 'output window, operand 0']
    #allocation3 [shape = 's32[2]{0}', space=sflag, size = 0x8, scoped, tag = 'scoped memory for get_informative_packed.1']
    #allocation4 [shape = 'u8[16384]{0}', space=vmem, size = 0x4000, scoped, tag = 'output window, operand 1']
    #allocation5 [shape = 's32[2]{0}', space=sflag, size = 0x8, scoped, tag = 'scoped memory for get_informative_packed.1']
    %8 = vsyncpa [#allocation3], 0
    %s9 = scalar_lea.sflag [#allocation3], 1
    %10 = vsyncpa %s9, 0
    %11 = vsyncpa [#allocation5], 0
    %s12 = scalar_lea.sflag [#allocation5], 1
    %13 = vsyncpa %s12, 0
    loop: start=0, step=1, limit=4
    $region2: #{get_informative_packed.1} parent=1 // loop_pre_header
      _
    $region3: #{get_informative_packed.1} parent=1 // loop_header
      %s15 = sphi 0, %s19
      %p16 = scmp.ge.s32.totalorder %s15, 4
      %s25 = sphi 0, %s27
      %s28 = sphi 0, %s25
      %s29 = sphi 0, %s28
      %s45 = sphi 0, %s29
      %s51 = sphi 0, %s53
      %s54 = sphi 0, %s51
      %s55 = sphi 0, %s54
      %s71 = sphi 0, %s55
      %s77 = sphi 0, %s79
      %s80 = sphi 0, %s77
      %s81 = sphi 0, %s80
      %s97 = sphi 0, %s81
    $region4: #{get_informative_packed.1} parent=1 // loop_header_branch
      %18 = sbr.rel (%p16) target = $region8
    $region5: #{get_informative_packed.1} parent=1 // loop_body
      %s20 = ssub.s32 %s15, 1
      %s21 = ssub.s32 %s15, 2
      %s22 = sadd.s32 %s15, 1
      %s23 = ssub.s32 %s15, %s22
      %p24 = scmp.eq.s32.totalorder %s23, 0
      %s26 = sadd.s32 %s25, 1
      %s27 = scalar_select %p24, %s25, %s26
      %p30 = pneg %p24
      %p31 = scmp.eq.s32.totalorder %s15, 1
      %p32 = por %p30, %p31
      %p33 = scmp.ne.s32.totalorder %s25, %s28
      %p34 = scmp.eq.s32.totalorder %s15, 0
      %p35 = por %p33, %p34
      %p36 = scmp.ne.s32.totalorder %s25, %s28
      %p37 = scmp.eq.s32.totalorder %s20, 1
      %p38 = por %p36, %p37
      %p39 = scmp.ne.s32.totalorder %s28, %s29
      %p40 = scmp.eq.s32.totalorder %s20, 0
      %p41 = por %p39, %p40
      %p42 = scmp.ne.s32.totalorder %s28, %s29
      %p43 = scmp.eq.s32.totalorder %s21, 1
      %p44 = por %p42, %p43
      %p46 = scmp.ne.s32.totalorder %s29, %s45
      %p47 = scmp.eq.s32.totalorder %s21, 0
      %p48 = por %p46, %p47
      %s49 = ssub.s32 %s15, %s22
      %p50 = scmp.eq.s32.totalorder %s49, 0
      %s52 = sadd.s32 %s51, 1
      %s53 = scalar_select %p50, %s51, %s52
      %p56 = pneg %p50
      %p57 = scmp.eq.s32.totalorder %s15, 1
      %p58 = por %p56, %p57
      %p59 = scmp.ne.s32.totalorder %s51, %s54
      %p60 = scmp.eq.s32.totalorder %s15, 0
      %p61 = por %p59, %p60
      %p62 = scmp.ne.s32.totalorder %s51, %s54
      %p63 = scmp.eq.s32.totalorder %s20, 1
      %p64 = por %p62, %p63
      %p65 = scmp.ne.s32.totalorder %s54, %s55
      %p66 = scmp.eq.s32.totalorder %s20, 0
      %p67 = por %p65, %p66
      %p68 = scmp.ne.s32.totalorder %s54, %s55
      %p69 = scmp.eq.s32.totalorder %s21, 1
      %p70 = por %p68, %p69
      %p72 = scmp.ne.s32.totalorder %s55, %s71
      %p73 = scmp.eq.s32.totalorder %s21, 0
      %p74 = por %p72, %p73
      %s75 = ssub.s32 %s15, %s22
      %p76 = scmp.eq.s32.totalorder %s75, 0
      %s78 = sadd.s32 %s77, 1
      %s79 = scalar_select %p76, %s77, %s78
      %p82 = pneg %p76
      %p83 = scmp.eq.s32.totalorder %s15, 1
      %p84 = por %p82, %p83
      %p85 = scmp.ne.s32.totalorder %s77, %s80
      %p86 = scmp.eq.s32.totalorder %s15, 0
      %p87 = por %p85, %p86
      %p88 = scmp.ne.s32.totalorder %s77, %s80
      %p89 = scmp.eq.s32.totalorder %s20, 1
      %p90 = por %p88, %p89
      %p91 = scmp.ne.s32.totalorder %s80, %s81
      %p92 = scmp.eq.s32.totalorder %s20, 0
      %p93 = por %p91, %p92
      %p94 = scmp.ne.s32.totalorder %s80, %s81
      %p95 = scmp.eq.s32.totalorder %s21, 1
      %p96 = por %p94, %p95
      %p98 = scmp.ne.s32.totalorder %s81, %s97
      %p99 = scmp.eq.s32.totalorder %s21, 0
      %p100 = por %p98, %p99
      %p101 = scmp.le.s32.totalorder 1, %s15
      %p102 = scmp.lt.s32.totalorder %s15, 3
      %p103 = pnand %p101, %p102
      %p104 = pneg %p103
      // Predicated region
      $region9: #{get_informative_packed.1} parent=5 // pred_check
        _
      $region10: #{get_informative_packed.1} parent=5 // pred_check_branch
        %106 = sbr.rel (%p103) target = $region12
      $region11: #{get_informative_packed.1} parent=5 // pred_region
        %s107 = ssub.s32 %s15, 1
      $region12: #{get_informative_packed.1} parent=5 // pred_fallthru
        _
      %p108 = scmp.lt.s32.totalorder %s15, 2
      // Predicated region
      $region13: #{get_informative_packed.1} parent=5 // pred_check
        %p109 = pneg %p108
      $region14: #{get_informative_packed.1} parent=5 // pred_check_branch
        %111 = sbr.rel (%p109) target = $region16
      $region15: #{get_informative_packed.1} parent=5 // pred_region
        // Predicated region
        $region17: #{get_informative_packed.1} parent=15 // pred_check
          %p112 = pneg %p35
        $region18: #{get_informative_packed.1} parent=15 // pred_check_branch
          %114 = sbr.rel (%p112) target = $region20
        $region19: #{get_informative_packed.1} parent=15 // pred_region
          %s115 = smul.u32 2, %s15
          %p116 = scmp.lt.s32.totalorder %s115, 3
          %s117 = scalar_select %p116, %s115, 3
          %s118 = smul.addr %s117, 8
          %s119 = scalar_lea.vmem %s0, %s118
          %s120 = smul.u32 2, %s15
        $region20: #{get_informative_packed.1} parent=15 // pred_fallthru
          _
      $region16: #{get_informative_packed.1} parent=5 // pred_fallthru
        _
      %p121 = scmp.le.s32.totalorder 1, %s15
      %p122 = scmp.lt.s32.totalorder %s15, 3
      %p123 = pnand %p121, %p122
      %p124 = pneg %p123
      // Predicated region
      $region21: #{get_informative_packed.1} parent=5 // pred_check
        _
      $region22: #{get_informative_packed.1} parent=5 // pred_check_branch
        %126 = sbr.rel (%p123) target = $region24
      $region23: #{get_informative_packed.1} parent=5 // pred_region
        %s127 = ssub.s32 %s15, 1
        %s128 = smul.u32 2, %s20
        %p129 = scmp.lt.s32.totalorder %s128, 3
        %s130 = scalar_select %p129, %s128, 3
        %s131 = smul.addr %s130, 8
        %s132 = scalar_lea.vmem %s0, %s131
        %p133 = pneg %p41
        %p134 = pneg %p38
        %p135 = pneg %p67
        %p136 = pneg %p64
        %s137 = sand.u32 %s54, 1
        %s138 = scalar_lea.sflag [#allocation3], %s137
        %s139 = sand.u32 %s54, 1
        %s140 = smul.addr %s139, 256
        %s141 = scalar_lea.vmem [#allocation2], %s140
        %p142 = pneg %p93
        %p143 = pneg %p90
        %s144 = sand.u32 %s80, 1
        %s145 = scalar_lea.sflag [#allocation5], %s144
        %s146 = sand.u32 %s80, 1
        %s147 = smul.addr %s146, 16
        %s148 = scalar_lea.vmem [#allocation4], %s147
        %s149 = smul.u32 2, %s20
        %p150 = scmp.lt.s32.totalorder %s149, 3
        %s151 = scalar_select %p150, %s149, 3
        %s152 = smul.addr %s151, 8
        %s153 = scalar_lea.vmem %s0, %s152
        %s154 = smul.u32 2, %s20
        %s155 = smul.u32 2, %s20
        %s156 = smul.u32 2, %s20
        %v157 = vld [vmem:[%s153] sm:$0xff]
        %v158 = vld [vmem:[%s153 + $0x8] sm:$0xff]
        %v159 = vlaneseq
        %v160 = vshrl.u32 %v159, 7
        %v161 = vadd.s32 %v160, 8
        %vm162 = vcmp.lt.s32.totalorder %v160, 0
        %v163 = vsub.s32 0, %v160
        %v164 = vsel %vm162, %v163, %v160
        %v165 = vshrl.u32 %v164, 4
        %v166 = vand.u32 %v164, 15
        %v167 = vsub.s32 0, %v166
        %v168 = vsel %vm162, %v167, %v166
        %vm169 = vcmp.lt.s32.totalorder %v161, 0
        %v170 = vsub.s32 0, %v161
        %v171 = vsel %vm169, %v170, %v161
        %v172 = vshrl.u32 %v171, 4
        %v173 = vand.u32 %v171, 15
        %v174 = vsub.s32 0, %v173
        %v175 = vsel %vm169, %v174, %v173
        %vm176 = vcmp.ne.s32.totalorder %v168, 0
        %vm177 = vcmp.ne.s32.totalorder %v175, 0
        %vm178 = vcmp.lt.s32.totalorder %v168, 0
        %vm179 = vcmp.lt.s32.totalorder %v175, 0
        %vm180 = vmand %vm178, %vm176
        %vm181 = vmand %vm179, %vm177
        %v182 = vadd.s32 %v168, 16
        %v183 = vadd.s32 %v175, 16
        %v184 = vsel %vm180, %v182, %v168
        %v185 = vsel %vm181, %v183, %v175
        %v186 = vlaneseq
        %v187 = vand.u32 %v186, 127
        %vm188 = vcmp.lt.s32.totalorder %v187, 0
        %v189 = vsub.s32 0, %v187
        %v190 = vsel %vm188, %v189, %v187
        %v191 = vshrl.u32 %v190, 4
        %v192 = vand.u32 %v190, 15
        %v193 = vsub.s32 0, %v192
        %v194 = vsel %vm188, %v193, %v192
        %vm195 = vcmp.ne.s32.totalorder %v194, 0
        %vm196 = vcmp.lt.s32.totalorder %v194, 0
        %vm197 = vmand %vm196, %vm195
        %v198 = vadd.s32 %v194, 16
        %v199 = vsel %vm197, %v198, %v194
        %vm200 = vcmp.ge.s32.totalorder %v184, 1
        %vm201 = vcmp.ge.s32.totalorder %v185, 1
        %vm202 = vcmp.lt.s32.totalorder %v184, 15
        %vm203 = vcmp.lt.s32.totalorder %v185, 15
        %vm204 = vcmp.ge.s32.totalorder %v199, 1
        %205 = vrot.lane.b32.xlu0 %v157, 127
        %v206 = vpop.permute.xlu0 %205
        %207 = vrot.lane.b32.xlu0 %v158, 127
        %v208 = vpop.permute.xlu0 %207
        %vm209 = vcmp.lt.s32.totalorder %v199, 15
        %v210 = vsel %vm209, %v206, 0.0
        %v211 = vsel %vm209, %v208, 0.0
        %v212 = vrot.slane %v210, 7
        %v213 = vrot.slane %v211, 7
        %vm214 = vcmp.lt.s32.totalorder %v160, 1
        %v215 = vsel %vm214, %v212, %v213
        %v216 = vsel %vm214, %v213, %v212
        %v217 = vsel %vm200, %v216, 0.0
        %v218 = vsel %vm201, %v215, 0.0
        %v219 = vadd.f32 %v217, %v157
        %v220 = vadd.f32 %v218, %v158
        %221 = vrot.lane.b32.xlu0 %v219, 1
        %v222 = vpop.permute.xlu0 %221
        %223 = vrot.lane.b32.xlu0 %v220, 1
        %v224 = vpop.permute.xlu0 %223
        %v225 = vsel %vm204, %v222, 0.0
        %v226 = vsel %vm204, %v224, 0.0
        %v227 = vsub.f32 %v219, %v225
        %v228 = vsub.f32 %v220, %v226
        %v229 = vrot.slane %v227, 7
        %v230 = vrot.slane %v228, 7
        %v231 = vsel %vm214, %v229, %v230
        %v232 = vsel %vm214, %v230, %v229
        %v233 = vsel %vm200, %v232, %v227
        %v234 = vsel %vm201, %v231, %v228
        %v235 = vrot.slane %v227, 1
        %v236 = vrot.slane %v228, 1
        %vm237 = vcmp.lt.s32.totalorder %v160, 7
        %v238 = vsel %vm237, %v235, %v236
        %v239 = vsel %vm237, %v236, %v235
        %v240 = vsel %vm202, %v238, %v227
        %v241 = vsel %vm203, %v239, %v228
        %v242 = vmax.f32 %v227, %v233
        %v243 = vmax.f32 %v228, %v234
        %v244 = vmax.f32 %v242, %v240
        %v245 = vmax.f32 %v243, %v241
        %v246 = vmin.f32 %v227, %v233
        %v247 = vmin.f32 %v228, %v234
        %v248 = vmin.f32 %v246, %v240
        %v249 = vmin.f32 %v247, %v241
        %v250 = vmax.f32 %v227, 0.0
        %v251 = vmax.f32 %v228, 0.0
        %v252 = vsub.f32 0.0, %v227
        %v253 = vsub.f32 0.0, %v228
        %v254 = vmax.f32 %v252, 0.0
        %v255 = vmax.f32 %v253, 0.0
        %vm256 = vcmp.eq.f32.partialorder %v244, %v227
        %vm257 = vcmp.eq.f32.partialorder %v245, %v228
        %v258 = vsel %vm256, %v250, 0.0
        %v259 = vsel %vm257, %v251, 0.0
        %vm260 = vcmp.eq.f32.partialorder %v248, %v227
        %vm261 = vcmp.eq.f32.partialorder %v249, %v228
        %v262 = vsel %vm260, %v254, 0.0
        %v263 = vsel %vm261, %v255, 0.0
        %264 = vst [vmem:[%s141] sm:$0xff] %v258
        %265 = vst [vmem:[%s141 + $0x80] sm:$0xff] %v259
        %266 = vst [vmem:[%s141 + $0x20] sm:$0xff] %v262
        %267 = vst [vmem:[%s141 + $0xa0] sm:$0xff] %v263
        %v268 = vmax.f32 %v258, %v262
        %v269 = vmax.f32 %v259, %v263
        %v270 = vadd.f32 %v217, %v210
        %v271 = vadd.f32 %v218, %v211
        %v272 = vrot.slane %v210, 1
        %v273 = vrot.slane %v211, 1
        %v274 = vsel %vm237, %v272, %v273
        %v275 = vsel %vm237, %v273, %v272
        %v276 = vsel %vm202, %v274, 0.0
        %v277 = vsel %vm203, %v275, 0.0
        %v278 = vadd.f32 %v270, %v276
        %v279 = vadd.f32 %v271, %v277
        %280 = vrot.lane.b32.xlu0 %v278, 1
        %v281 = vpop.permute.xlu0 %280
        %282 = vrot.lane.b32.xlu0 %v279, 1
        %v283 = vpop.permute.xlu0 %282
        %v284 = vsel %vm204, %v281, 0.0
        %v285 = vsel %vm204, %v283, 0.0
        %v286 = vsub.f32 %v278, %v284
        %v287 = vsub.f32 %v279, %v285
        %v288 = vrot.slane %v286, 7
        %v289 = vrot.slane %v287, 7
        %v290 = vsel %vm214, %v288, %v289
        %v291 = vsel %vm214, %v289, %v288
        %v292 = vsel %vm200, %v291, %v286
        %v293 = vsel %vm201, %v290, %v287
        %v294 = vrot.slane %v286, 1
        %v295 = vrot.slane %v287, 1
        %v296 = vsel %vm237, %v294, %v295
        %v297 = vsel %vm237, %v295, %v294
        %v298 = vsel %vm202, %v296, %v286
        %v299 = vsel %vm203, %v297, %v287
        %v300 = vmax.f32 %v286, %v292
        %v301 = vmax.f32 %v287, %v293
        %v302 = vmax.f32 %v300, %v298
        %v303 = vmax.f32 %v301, %v299
        %v304 = vmin.f32 %v286, %v292
        %v305 = vmin.f32 %v287, %v293
        %v306 = vmin.f32 %v304, %v298
        %v307 = vmin.f32 %v305, %v299
        %v308 = vmax.f32 %v286, 0.0
        %v309 = vmax.f32 %v287, 0.0
        %v310 = vsub.f32 0.0, %v286
        %v311 = vsub.f32 0.0, %v287
        %v312 = vmax.f32 %v310, 0.0
        %v313 = vmax.f32 %v311, 0.0
        %vm314 = vcmp.eq.f32.partialorder %v302, %v286
        %vm315 = vcmp.eq.f32.partialorder %v303, %v287
        %v316 = vsel %vm314, %v308, 0.0
        %v317 = vsel %vm315, %v309, 0.0
        %vm318 = vcmp.eq.f32.partialorder %v306, %v286
        %vm319 = vcmp.eq.f32.partialorder %v307, %v287
        %v320 = vsel %vm318, %v312, 0.0
        %v321 = vsel %vm319, %v313, 0.0
        %322 = vst [vmem:[%s141 + $0x8] sm:$0xff] %v316
        %323 = vst [vmem:[%s141 + $0x88] sm:$0xff] %v317
        %324 = vst [vmem:[%s141 + $0x28] sm:$0xff] %v320
        %325 = vst [vmem:[%s141 + $0xa8] sm:$0xff] %v321
        %v326 = vmax.f32 %v316, %v320
        %v327 = vmax.f32 %v317, %v321
        %v328 = vmax.f32 %v268, %v326
        %v329 = vmax.f32 %v269, %v327
        %330 = vrot.lane.b32.xlu0 %v157, 1
        %v331 = vpop.permute.xlu0 %330
        %332 = vrot.lane.b32.xlu0 %v158, 1
        %v333 = vpop.permute.xlu0 %332
        %v334 = vsel %vm204, %v331, 0.0
        %v335 = vsel %vm204, %v333, 0.0
        %v336 = vrot.slane %v334, 7
        %v337 = vrot.slane %v335, 7
        %v338 = vsel %vm214, %v336, %v337
        %v339 = vsel %vm214, %v337, %v336
        %v340 = vsel %vm200, %v339, 0.0
        %v341 = vsel %vm201, %v338, 0.0
        %v342 = vadd.f32 %v340, %v157
        %v343 = vadd.f32 %v341, %v158
        %344 = vrot.lane.b32.xlu0 %v342, 1
        %v345 = vpop.permute.xlu0 %344
        %346 = vrot.lane.b32.xlu0 %v343, 1
        %v347 = vpop.permute.xlu0 %346
        %v348 = vsel %vm204, %v345, 0.0
        %v349 = vsel %vm204, %v347, 0.0
        %v350 = vsub.f32 %v342, %v348
        %v351 = vsub.f32 %v343, %v349
        %v352 = vrot.slane %v350, 7
        %v353 = vrot.slane %v351, 7
        %v354 = vsel %vm214, %v352, %v353
        %v355 = vsel %vm214, %v353, %v352
        %v356 = vsel %vm200, %v355, %v350
        %v357 = vsel %vm201, %v354, %v351
        %v358 = vrot.slane %v350, 1
        %v359 = vrot.slane %v351, 1
        %v360 = vsel %vm237, %v358, %v359
        %v361 = vsel %vm237, %v359, %v358
        %v362 = vsel %vm202, %v360, %v350
        %v363 = vsel %vm203, %v361, %v351
        %v364 = vmax.f32 %v350, %v356
        %v365 = vmax.f32 %v351, %v357
        %v366 = vmax.f32 %v364, %v362
        %v367 = vmax.f32 %v365, %v363
        %v368 = vmin.f32 %v350, %v356
        %v369 = vmin.f32 %v351, %v357
        %v370 = vmin.f32 %v368, %v362
        %v371 = vmin.f32 %v369, %v363
        %v372 = vmax.f32 %v350, 0.0
        %v373 = vmax.f32 %v351, 0.0
        %v374 = vsub.f32 0.0, %v350
        %v375 = vsub.f32 0.0, %v351
        %v376 = vmax.f32 %v374, 0.0
        %v377 = vmax.f32 %v375, 0.0
        %vm378 = vcmp.eq.f32.partialorder %v366, %v350
        %vm379 = vcmp.eq.f32.partialorder %v367, %v351
        %v380 = vsel %vm378, %v372, 0.0
        %v381 = vsel %vm379, %v373, 0.0
        %vm382 = vcmp.eq.f32.partialorder %v370, %v350
        %vm383 = vcmp.eq.f32.partialorder %v371, %v351
        %v384 = vsel %vm382, %v376, 0.0
        %v385 = vsel %vm383, %v377, 0.0
        %386 = vst [vmem:[%s141 + $0x10] sm:$0xff] %v380
        %387 = vst [vmem:[%s141 + $0x90] sm:$0xff] %v381
        %388 = vst [vmem:[%s141 + $0x30] sm:$0xff] %v384
        %389 = vst [vmem:[%s141 + $0xb0] sm:$0xff] %v385
        %v390 = vmax.f32 %v380, %v384
        %v391 = vmax.f32 %v381, %v385
        %v392 = vmax.f32 %v328, %v390
        %v393 = vmax.f32 %v329, %v391
        %v394 = vadd.f32 %v342, %v276
        %v395 = vadd.f32 %v343, %v277
        %396 = vrot.lane.b32.xlu0 %v394, 1
        %v397 = vpop.permute.xlu0 %396
        %398 = vrot.lane.b32.xlu0 %v395, 1
        %v399 = vpop.permute.xlu0 %398
        %v400 = vsel %vm204, %v397, 0.0
        %v401 = vsel %vm204, %v399, 0.0
        %v402 = vsub.f32 %v394, %v400
        %v403 = vsub.f32 %v395, %v401
        %v404 = vrot.slane %v402, 7
        %v405 = vrot.slane %v403, 7
        %v406 = vsel %vm214, %v404, %v405
        %v407 = vsel %vm214, %v405, %v404
        %v408 = vsel %vm200, %v407, %v402
        %v409 = vsel %vm201, %v406, %v403
        %v410 = vrot.slane %v402, 1
        %v411 = vrot.slane %v403, 1
        %v412 = vsel %vm237, %v410, %v411
        %v413 = vsel %vm237, %v411, %v410
        %v414 = vsel %vm202, %v412, %v402
        %v415 = vsel %vm203, %v413, %v403
        %v416 = vmax.f32 %v402, %v408
        %v417 = vmax.f32 %v403, %v409
        %v418 = vmax.f32 %v416, %v414
        %v419 = vmax.f32 %v417, %v415
        %v420 = vmin.f32 %v402, %v408
        %v421 = vmin.f32 %v403, %v409
        %v422 = vmin.f32 %v420, %v414
        %v423 = vmin.f32 %v421, %v415
        %v424 = vmax.f32 %v402, 0.0
        %v425 = vmax.f32 %v403, 0.0
        %v426 = vsub.f32 0.0, %v402
        %v427 = vsub.f32 0.0, %v403
        %v428 = vmax.f32 %v426, 0.0
        %v429 = vmax.f32 %v427, 0.0
        %vm430 = vcmp.eq.f32.partialorder %v418, %v402
        %vm431 = vcmp.eq.f32.partialorder %v419, %v403
        %v432 = vsel %vm430, %v424, 0.0
        %v433 = vsel %vm431, %v425, 0.0
        %vm434 = vcmp.eq.f32.partialorder %v422, %v402
        %vm435 = vcmp.eq.f32.partialorder %v423, %v403
        %v436 = vsel %vm434, %v428, 0.0
        %v437 = vsel %vm435, %v429, 0.0
        %438 = vst [vmem:[%s141 + $0x18] sm:$0xff] %v432
        %439 = vst [vmem:[%s141 + $0x98] sm:$0xff] %v433
        %440 = vst [vmem:[%s141 + $0x38] sm:$0xff] %v436
        %441 = vst [vmem:[%s141 + $0xb8] sm:$0xff] %v437
        %v442 = vmax.f32 %v432, %v436
        %v443 = vmax.f32 %v433, %v437
        %v444 = vmax.f32 %v392, %v442
        %v445 = vmax.f32 %v393, %v443
        %v446 = vrot.slane %v334, 1
        %v447 = vrot.slane %v335, 1
        %v448 = vsel %vm237, %v446, %v447
        %v449 = vsel %vm237, %v447, %v446
        %v450 = vsel %vm202, %v448, 0.0
        %v451 = vsel %vm203, %v449, 0.0
        %v452 = vadd.f32 %v157, %v450
        %v453 = vadd.f32 %v158, %v451
        %v454 = vrot.slane %v452, 7
        %v455 = vrot.slane %v453, 7
        %v456 = vsel %vm214, %v454, %v455
        %v457 = vsel %vm214, %v455, %v454
        %v458 = vsel %vm200, %v457, 0.0
        %v459 = vsel %vm201, %v456, 0.0
        %v460 = vsub.f32 %v452, %v458
        %v461 = vsub.f32 %v453, %v459
        %v462 = vrot.slane %v460, 7
        %v463 = vrot.slane %v461, 7
        %v464 = vsel %vm214, %v462, %v463
        %v465 = vsel %vm214, %v463, %v462
        %v466 = vsel %vm200, %v465, %v460
        %v467 = vsel %vm201, %v464, %v461
        %v468 = vrot.slane %v460, 1
        %v469 = vrot.slane %v461, 1
        %v470 = vsel %vm237, %v468, %v469
        %v471 = vsel %vm237, %v469, %v468
        %v472 = vsel %vm202, %v470, %v460
        %v473 = vsel %vm203, %v471, %v461
        %v474 = vmax.f32 %v460, %v466
        %v475 = vmax.f32 %v461, %v467
        %v476 = vmax.f32 %v474, %v472
        %v477 = vmax.f32 %v475, %v473
        %v478 = vmin.f32 %v460, %v466
        %v479 = vmin.f32 %v461, %v467
        %v480 = vmin.f32 %v478, %v472
        %v481 = vmin.f32 %v479, %v473
        %v482 = vmax.f32 %v460, 0.0
        %v483 = vmax.f32 %v461, 0.0
        %v484 = vsub.f32 0.0, %v460
        %v485 = vsub.f32 0.0, %v461
        %v486 = vmax.f32 %v484, 0.0
        %v487 = vmax.f32 %v485, 0.0
        %vm488 = vcmp.eq.f32.partialorder %v476, %v460
        %vm489 = vcmp.eq.f32.partialorder %v477, %v461
        %v490 = vsel %vm488, %v482, 0.0
        %v491 = vsel %vm489, %v483, 0.0
        %vm492 = vcmp.eq.f32.partialorder %v480, %v460
        %vm493 = vcmp.eq.f32.partialorder %v481, %v461
        %v494 = vsel %vm492, %v486, 0.0
        %v495 = vsel %vm493, %v487, 0.0
        %496 = vst [vmem:[%s141 + $0x40] sm:$0xff] %v490
        %497 = vst [vmem:[%s141 + $0xc0] sm:$0xff] %v491
        %498 = vst [vmem:[%s141 + $0x60] sm:$0xff] %v494
        %499 = vst [vmem:[%s141 + $0xe0] sm:$0xff] %v495
        %v500 = vmax.f32 %v490, %v494
        %v501 = vmax.f32 %v491, %v495
        %v502 = vmax.f32 %v444, %v500
        %v503 = vmax.f32 %v445, %v501
        %v504 = vrot.slane %v157, 1
        %v505 = vrot.slane %v158, 1
        %v506 = vsel %vm237, %v504, %v505
        %v507 = vsel %vm237, %v505, %v504
        %v508 = vsel %vm202, %v506, 0.0
        %v509 = vsel %vm203, %v507, 0.0
        %v510 = vadd.f32 %v450, %v508
        %v511 = vadd.f32 %v451, %v509
        %v512 = vadd.f32 %v510, %v276
        %v513 = vadd.f32 %v511, %v277
        %v514 = vrot.slane %v512, 7
        %v515 = vrot.slane %v513, 7
        %v516 = vsel %vm214, %v514, %v515
        %v517 = vsel %vm214, %v515, %v514
        %v518 = vsel %vm200, %v517, 0.0
        %v519 = vsel %vm201, %v516, 0.0
        %v520 = vsub.f32 %v512, %v518
        %v521 = vsub.f32 %v513, %v519
        %v522 = vrot.slane %v520, 7
        %v523 = vrot.slane %v521, 7
        %v524 = vsel %vm214, %v522, %v523
        %v525 = vsel %vm214, %v523, %v522
        %v526 = vsel %vm200, %v525, %v520
        %v527 = vsel %vm201, %v524, %v521
        %v528 = vrot.slane %v520, 1
        %v529 = vrot.slane %v521, 1
        %v530 = vsel %vm237, %v528, %v529
        %v531 = vsel %vm237, %v529, %v528
        %v532 = vsel %vm202, %v530, %v520
        %v533 = vsel %vm203, %v531, %v521
        %v534 = vmax.f32 %v520, %v526
        %v535 = vmax.f32 %v521, %v527
        %v536 = vmax.f32 %v534, %v532
        %v537 = vmax.f32 %v535, %v533
        %v538 = vmin.f32 %v520, %v526
        %v539 = vmin.f32 %v521, %v527
        %v540 = vmin.f32 %v538, %v532
        %v541 = vmin.f32 %v539, %v533
        %v542 = vmax.f32 %v520, 0.0
        %v543 = vmax.f32 %v521, 0.0
        %v544 = vsub.f32 0.0, %v520
        %v545 = vsub.f32 0.0, %v521
        %v546 = vmax.f32 %v544, 0.0
        %v547 = vmax.f32 %v545, 0.0
        %vm548 = vcmp.eq.f32.partialorder %v536, %v520
        %vm549 = vcmp.eq.f32.partialorder %v537, %v521
        %v550 = vsel %vm548, %v542, 0.0
        %v551 = vsel %vm549, %v543, 0.0
        %vm552 = vcmp.eq.f32.partialorder %v540, %v520
        %vm553 = vcmp.eq.f32.partialorder %v541, %v521
        %v554 = vsel %vm552, %v546, 0.0
        %v555 = vsel %vm553, %v547, 0.0
        %556 = vst [vmem:[%s141 + $0x48] sm:$0xff] %v550
        %557 = vst [vmem:[%s141 + $0xc8] sm:$0xff] %v551
        %558 = vst [vmem:[%s141 + $0x68] sm:$0xff] %v554
        %559 = vst [vmem:[%s141 + $0xe8] sm:$0xff] %v555
        %v560 = vmax.f32 %v550, %v554
        %v561 = vmax.f32 %v551, %v555
        %v562 = vmax.f32 %v502, %v560
        %v563 = vmax.f32 %v503, %v561
        %v564 = vrot.slane %v342, 7
        %v565 = vrot.slane %v343, 7
        %v566 = vsel %vm214, %v564, %v565
        %v567 = vsel %vm214, %v565, %v564
        %v568 = vsel %vm200, %v567, 0.0
        %v569 = vsel %vm201, %v566, 0.0
        %v570 = vsub.f32 %v342, %v568
        %v571 = vsub.f32 %v343, %v569
        %v572 = vrot.slane %v570, 7
        %v573 = vrot.slane %v571, 7
        %v574 = vsel %vm214, %v572, %v573
        %v575 = vsel %vm214, %v573, %v572
        %v576 = vsel %vm200, %v575, %v570
        %v577 = vsel %vm201, %v574, %v571
        %v578 = vrot.slane %v570, 1
        %v579 = vrot.slane %v571, 1
        %v580 = vsel %vm237, %v578, %v579
        %v581 = vsel %vm237, %v579, %v578
        %v582 = vsel %vm202, %v580, %v570
        %v583 = vsel %vm203, %v581, %v571
        %v584 = vmax.f32 %v570, %v576
        %v585 = vmax.f32 %v571, %v577
        %v586 = vmax.f32 %v584, %v582
        %v587 = vmax.f32 %v585, %v583
        %v588 = vmin.f32 %v570, %v576
        %v589 = vmin.f32 %v571, %v577
        %v590 = vmin.f32 %v588, %v582
        %v591 = vmin.f32 %v589, %v583
        %v592 = vmax.f32 %v570, 0.0
        %v593 = vmax.f32 %v571, 0.0
        %v594 = vsub.f32 0.0, %v570
        %v595 = vsub.f32 0.0, %v571
        %v596 = vmax.f32 %v594, 0.0
        %v597 = vmax.f32 %v595, 0.0
        %vm598 = vcmp.eq.f32.partialorder %v586, %v570
        %vm599 = vcmp.eq.f32.partialorder %v587, %v571
        %v600 = vsel %vm598, %v592, 0.0
        %v601 = vsel %vm599, %v593, 0.0
        %vm602 = vcmp.eq.f32.partialorder %v590, %v570
        %vm603 = vcmp.eq.f32.partialorder %v591, %v571
        %v604 = vsel %vm602, %v596, 0.0
        %v605 = vsel %vm603, %v597, 0.0
        %606 = vst [vmem:[%s141 + $0x50] sm:$0xff] %v600
        %607 = vst [vmem:[%s141 + $0xd0] sm:$0xff] %v601
        %608 = vst [vmem:[%s141 + $0x70] sm:$0xff] %v604
        %609 = vst [vmem:[%s141 + $0xf0] sm:$0xff] %v605
        %v610 = vmax.f32 %v600, %v604
        %v611 = vmax.f32 %v601, %v605
        %v612 = vmax.f32 %v562, %v610
        %v613 = vmax.f32 %v563, %v611
        %v614 = vrot.slane %v394, 7
        %v615 = vrot.slane %v395, 7
        %v616 = vsel %vm214, %v614, %v615
        %v617 = vsel %vm214, %v615, %v614
        %v618 = vsel %vm200, %v617, 0.0
        %v619 = vsel %vm201, %v616, 0.0
        %v620 = vsub.f32 %v394, %v618
        %v621 = vsub.f32 %v395, %v619
        %v622 = vrot.slane %v620, 7
        %v623 = vrot.slane %v621, 7
        %v624 = vsel %vm214, %v622, %v623
        %v625 = vsel %vm214, %v623, %v622
        %v626 = vsel %vm200, %v625, %v620
        %v627 = vsel %vm201, %v624, %v621
        %v628 = vrot.slane %v620, 1
        %v629 = vrot.slane %v621, 1
        %v630 = vsel %vm237, %v628, %v629
        %v631 = vsel %vm237, %v629, %v628
        %v632 = vsel %vm202, %v630, %v620
        %v633 = vsel %vm203, %v631, %v621
        %v634 = vmax.f32 %v620, %v626
        %v635 = vmax.f32 %v621, %v627
        %v636 = vmax.f32 %v634, %v632
        %v637 = vmax.f32 %v635, %v633
        %v638 = vmin.f32 %v620, %v626
        %v639 = vmin.f32 %v621, %v627
        %v640 = vmin.f32 %v638, %v632
        %v641 = vmin.f32 %v639, %v633
        %v642 = vmax.f32 %v620, 0.0
        %v643 = vmax.f32 %v621, 0.0
        %v644 = vsub.f32 0.0, %v620
        %v645 = vsub.f32 0.0, %v621
        %v646 = vmax.f32 %v644, 0.0
        %v647 = vmax.f32 %v645, 0.0
        %vm648 = vcmp.eq.f32.partialorder %v636, %v620
        %vm649 = vcmp.eq.f32.partialorder %v637, %v621
        %v650 = vsel %vm648, %v642, 0.0
        %v651 = vsel %vm649, %v643, 0.0
        %vm652 = vcmp.eq.f32.partialorder %v640, %v620
        %vm653 = vcmp.eq.f32.partialorder %v641, %v621
        %v654 = vsel %vm652, %v646, 0.0
        %v655 = vsel %vm653, %v647, 0.0
        %656 = vst [vmem:[%s141 + $0x58] sm:$0xff] %v650
        %657 = vst [vmem:[%s141 + $0xd8] sm:$0xff] %v651
        %658 = vst [vmem:[%s141 + $0x78] sm:$0xff] %v654
        %659 = vst [vmem:[%s141 + $0xf8] sm:$0xff] %v655
        %v660 = vmax.f32 %v650, %v654
        %v661 = vmax.f32 %v651, %v655
        %v662 = vmax.f32 %v612, %v660
        %v663 = vmax.f32 %v613, %v661
        %664 = vst [vmem:[%s148] sm:$0xff] %v662
        %665 = vst [vmem:[%s148 + $0x8] sm:$0xff] %v663
        %s666 = sand.u32 %s54, 1
        %s667 = scalar_lea.sflag [#allocation3], %s666
        %s668 = sand.u32 %s54, 1
        %s669 = smul.addr %s668, 256
        %s670 = scalar_lea.vmem [#allocation2], %s669
        %s671 = sand.u32 %s80, 1
        %s672 = scalar_lea.sflag [#allocation5], %s671
        %s673 = sand.u32 %s80, 1
        %s674 = smul.addr %s673, 16
        %s675 = scalar_lea.vmem [#allocation4], %s674
        // Predicated region
        $region25: #{get_informative_packed.1} parent=23 // pred_check
          %p676 = pneg %p64
        $region26: #{get_informative_packed.1} parent=23 // pred_check_branch
          %678 = sbr.rel (%p676) target = $region28
        $region27: #{get_informative_packed.1} parent=23 // pred_region
          %s679 = smul.u32 2, %s20
          %681 = vsyncadd %s667, 0
          %s682 = smul.addr %s679, 16
          %s683 = smul.addr %s682, 8
          %s684 = scalar_lea.hbm %s1, %s683
          %s685 = sshll.u32 %s670, 4
          %s686 = int_to_ptr.vmem [resolvable:$true] %s685
          %s687 = sshll.u32 %s684, 4
          %s688 = int_to_ptr.hbm [resolvable:$true] %s687
          %693 = dma.vmem_to_hbm [thread:$0]  %s686, 4096, %s688, %s667, 2048, 2048, 128
        $region28: #{get_informative_packed.1} parent=23 // pred_fallthru
          _
        // Predicated region
        $region29: #{get_informative_packed.1} parent=23 // pred_check
          %p694 = pneg %p90
        $region30: #{get_informative_packed.1} parent=23 // pred_check_branch
          %696 = sbr.rel (%p694) target = $region32
        $region31: #{get_informative_packed.1} parent=23 // pred_region
          %s697 = smul.u32 2, %s20
          %699 = vsyncadd %s672, 0
          %s700 = smul.addr %s697, 8
          %s701 = scalar_lea.hbm %s2, %s700
          %s702 = sshll.u32 %s675, 4
          %s703 = int_to_ptr.vmem [resolvable:$true] %s702
          %s704 = sshll.u32 %s701, 4
          %s705 = int_to_ptr.hbm [resolvable:$true] %s704
          %710 = dma.vmem_to_hbm [thread:$0]  %s703, 256, %s705, %s672, 128, 128, 8
        $region32: #{get_informative_packed.1} parent=23 // pred_fallthru
          _
      $region24: #{get_informative_packed.1} parent=5 // pred_fallthru
        _
      %p711 = scmp.le.s32.totalorder 2, %s15
      // Predicated region
      $region33: #{get_informative_packed.1} parent=5 // pred_check
        %p712 = pneg %p711
      $region34: #{get_informative_packed.1} parent=5 // pred_check_branch
        %714 = sbr.rel (%p712) target = $region36
      $region35: #{get_informative_packed.1} parent=5 // pred_region
        %s715 = ssub.s32 %s15, 2
        // Predicated region
        $region37: #{get_informative_packed.1} parent=35 // pred_check
          %p716 = pneg %p70
        $region38: #{get_informative_packed.1} parent=35 // pred_check_branch
          %718 = sbr.rel (%p716) target = $region40
        $region39: #{get_informative_packed.1} parent=35 // pred_region
          %s719 = sand.u32 %s55, 1
          %s720 = scalar_lea.sflag [#allocation3], %s719
          %s721 = sand.u32 %s55, 1
          %s722 = smul.addr %s721, 256
          %s723 = scalar_lea.vmem [#allocation2], %s722
          %725 = dma.done %s720, 4096
        $region40: #{get_informative_packed.1} parent=35 // pred_fallthru
          _
        // Predicated region
        $region41: #{get_informative_packed.1} parent=35 // pred_check
          %p726 = pneg %p96
        $region42: #{get_informative_packed.1} parent=35 // pred_check_branch
          %728 = sbr.rel (%p726) target = $region44
        $region43: #{get_informative_packed.1} parent=35 // pred_region
          %s729 = sand.u32 %s81, 1
          %s730 = scalar_lea.sflag [#allocation5], %s729
          %s731 = sand.u32 %s81, 1
          %s732 = smul.addr %s731, 16
          %s733 = scalar_lea.vmem [#allocation4], %s732
          %735 = dma.done %s730, 256
        $region44: #{get_informative_packed.1} parent=35 // pred_fallthru
          _
      $region36: #{get_informative_packed.1} parent=5 // pred_fallthru
        _
    $region6: #{get_informative_packed.1} parent=1 // loop_footer
      %s19 = sadd.s32 1, %s15
    $region7: #{get_informative_packed.1} parent=1 // loop_footer_branch
      %14 = sbr.rel target = $region3
    $region8: #{get_informative_packed.1} parent=1 // loop_exit
      _
    %736 = vsyncpa [#allocation3], 1
    %s737 = scalar_lea.sflag [#allocation3], 1
    %738 = vsyncpa %s737, 1
    %739 = vsyncpa [#allocation5], 1
    %s740 = scalar_lea.sflag [#allocation5], 1
    %741 = vsyncpa %s740, 1

</llo_original>
